<compile_context>
chip_gen: v5e
topology: v5e:2x2
jax: 0.10.0
libtpu: 0.0.40
codegen_flags: <defaults>
</compile_context>

<pallas_src>
import jax
import jax.numpy as jnp
from jax.experimental import pallas as pl
from jax.experimental.pallas import tpu as pltpu

# ---- problem sizes (small, consistent with the module) ----
BATCH = 8
STATE_DIM = 16
HIDDEN = (32, 32)
ACTION_DIM = 4
NUM_ATOMS = 8
V_MIN, V_MAX = -10.0, 10.0  # only defines the support grid; unused in forward

H1, H2 = HIDDEN
D_OUT = ACTION_DIM * NUM_ATOMS  # 32

# ---- packed parameter slab layout (all row offsets 8-aligned) ----
W1_OFF = 0                        # rows   0:16   w1 (STATE_DIM, H1)
B1_OFF = W1_OFF + STATE_DIM       # row   16      b1 (1, H1), rows 17:24 zero pad
W2_OFF = B1_OFF + 8               # rows  24:56   w2 (H1, H2)
B2_OFF = W2_OFF + H1              # row   56      b2 (1, H2)
W3_OFF = B2_OFF + 8               # rows  64:96   w3 (H2, D_OUT)
B3_OFF = W3_OFF + H2              # row   96      b3 (1, D_OUT)
G_OFF = B3_OFF + 8                # rows 104:136  block-diag ones (D_OUT, D_OUT)
SLAB_ROWS = G_OFF + D_OUT         # 136
SLAB_COLS = max(H1, H2, D_OUT)    # 32


def c51_kernel(x_ref, p_ref, out_ref):
    x = x_ref[...]                                            # (B, STATE_DIM) f32

    # Static views into the packed parameter slab (no per-tensor DMAs).
    w1 = p_ref[W1_OFF:W1_OFF + STATE_DIM, :]
    b1 = p_ref[B1_OFF:B1_OFF + 1, :]
    w2 = p_ref[W2_OFF:W2_OFF + H1, :]
    b2 = p_ref[B2_OFF:B2_OFF + 1, :]
    w3 = p_ref[W3_OFF:W3_OFF + H2, :]
    b3 = p_ref[B3_OFF:B3_OFF + 1, :]
    g = p_ref[G_OFF:G_OFF + D_OUT, :]                         # block-diag ones

    # --- MLP hot path on the MXU: bf16 operands, f32 accumulate ---
    bf16 = jnp.bfloat16
    h1 = jnp.maximum(
        jnp.dot(x.astype(bf16), w1.astype(bf16),
                preferred_element_type=jnp.float32) + b1, 0.0)
    h2 = jnp.maximum(
        jnp.dot(h1.astype(bf16), w2.astype(bf16),
                preferred_element_type=jnp.float32) + b2, 0.0)
    logits = jnp.dot(h2.astype(bf16), w3.astype(bf16),
                     preferred_element_type=jnp.float32) + b3  # (B, D_OUT) f32

    # --- fused softmax over atoms, per action group ---
    # A per-row constant is uniform within every atom group, so one row-wise
    # max gives identical softmax results as per-group maxes (single XLU
    # reduce instead of 4 sliced reductions + broadcasts + concat).
    m = jnp.max(logits, axis=-1, keepdims=True)               # (B, 1)
    e = jnp.exp(logits - m)                                    # one EUP exp
    # Group sums broadcast back to each group's lanes via one tiny f32 matmul
    # against the block-diagonal ones matrix.  Full precision so that
    # e / sum(e) normalizes exactly.
    s = jnp.dot(e, g, preferred_element_type=jnp.float32,
                precision=jax.lax.Precision.HIGHEST)           # (B, D_OUT)
    # Exact reciprocal (approx=False): distributions sum to 1 up to f32
    # rounding — this is what fixed the previous sum-to-1 assertion failure.
    out_ref[...] = e * pl.reciprocal(s)                        # lane-dense store


def c51_forward(state, slab):
    """state: (B, STATE_DIM) f32, B a multiple of 8.  Returns (B, A, N_atoms)."""
    B = state.shape[0]
    vmem = pl.BlockSpec(memory_space=pltpu.MemorySpace.VMEM)
    out2d = pl.pallas_call(
        c51_kernel,
        out_shape=jax.ShapeDtypeStruct((B, D_OUT), jnp.float32),
        in_specs=[vmem, vmem],
        out_specs=vmem,
    )(state, slab)
    # Layout plumbing outside the kernel: (B, 32) -> (B, ACTION_DIM, NUM_ATOMS),
    # matching PyTorch's .view(-1, action_dim, num_atoms) + softmax(dim=-1).
    return out2d.reshape(B, ACTION_DIM, NUM_ATOMS)


def init_params(key):
    """Deterministic init mimicking nn.Linear's U(-1/sqrt(fan_in), 1/sqrt(fan_in))."""
    dims = [STATE_DIM, H1, H2, D_OUT]
    params = []
    for i in range(3):
        fan_in, fan_out = dims[i], dims[i + 1]
        key, kw, kb = jax.random.split(key, 3)
        bound = 1.0 / jnp.sqrt(jnp.float32(fan_in))
        # stored as (in, out): kernel does x @ W  (== PyTorch x @ W.T + b)
        w = jax.random.uniform(kw, (fan_in, fan_out), jnp.float32, -bound, bound)
        b = jax.random.uniform(kb, (1, fan_out), jnp.float32, -bound, bound)
        params += [w, b]
    return tuple(params)


def pack_params(w1, b1, w2, b2, w3, b3):
    """Pack all parameters (+ group-sum matrix) into one (136, 32) f32 slab."""
    def pad_rows(a, rows):
        return jnp.pad(a, ((0, rows - a.shape[0]), (0, 0)))

    # Block-diagonal ones: G[i, j] = 1 iff i and j belong to the same action.
    gi = jnp.arange(D_OUT)[:, None] // NUM_ATOMS
    gj = jnp.arange(D_OUT)[None, :] // NUM_ATOMS
    G = (gi == gj).astype(jnp.float32)

    slab = jnp.concatenate([
        w1,                  # rows   0:16
        pad_rows(b1, 8),     # rows  16:24  (bias in row 16)
        w2,                  # rows  24:56
        pad_rows(b2, 8),     # rows  56:64
        w3,                  # rows  64:96
        pad_rows(b3, 8),     # rows  96:104
        G,                   # rows 104:136
    ], axis=0)
    assert slab.shape == (SLAB_ROWS, SLAB_COLS)
    return slab


def reference_forward(state, params):
    w1, b1, w2, b2, w3, b3 = params
    h1 = jnp.maximum(state @ w1 + b1, 0.0)
    h2 = jnp.maximum(h1 @ w2 + b2, 0.0)
    logits = (h2 @ w3 + b3).reshape(-1, ACTION_DIM, NUM_ATOMS)
    return jax.nn.softmax(logits, axis=-1)


if __name__ == "__main__":
    key = jax.random.PRNGKey(0)
    key, kx = jax.random.split(key)
    state = jax.random.normal(kx, (BATCH, STATE_DIM), jnp.float32)
    params = init_params(key)
    slab = pack_params(*params)

    out = jax.block_until_ready(c51_forward(state, slab))
    ref = reference_forward(state, params)

    assert out.shape == (BATCH, ACTION_DIM, NUM_ATOMS)
    # bf16 MXU operands (f32 accumulate) => ~0.3-1% relative error vs the
    # all-f32 reference; tolerance loosened accordingly (per the review).
    assert jnp.allclose(out, ref, atol=3e-2, rtol=3e-2)
    # Exact reciprocal + f32 group-sum => distributions sum to 1 tightly.
    assert jnp.allclose(out.sum(-1), jnp.ones((BATCH, ACTION_DIM)), atol=1e-3)

    print("KERNEL_OK")
</pallas_src>

<mosaic_0001>
module attributes {stable_mosaic.version = 11 : i64} {
  func.func @c51_kernel(%arg0: memref<8x16xf32, #tpu.memory_space<vmem>>, %arg1: memref<136x32xf32, #tpu.memory_space<vmem>>, %arg2: memref<8x32xf32, #tpu.memory_space<vmem>>) attributes {dimension_semantics = [], scalar_prefetch = 0 : i64, scratch_operands = 0 : i64, tpu.core_type = #tpu.core_type<tc>} {
    %c0 = arith.constant 0 : index
    %c0_0 = arith.constant 0 : index
    %0 = vector.load %arg0[%c0, %c0_0] : memref<8x16xf32, #tpu.memory_space<vmem>>, vector<8x16xf32>
    %c0_1 = arith.constant 0 : index
    %c0_2 = arith.constant 0 : index
    %1 = vector.load %arg1[%c0_1, %c0_2] : memref<136x32xf32, #tpu.memory_space<vmem>>, vector<16x32xf32>
    %c16 = arith.constant 16 : index
    %c0_3 = arith.constant 0 : index
    %2 = vector.load %arg1[%c16, %c0_3] : memref<136x32xf32, #tpu.memory_space<vmem>>, vector<1x32xf32>
    %c24 = arith.constant 24 : index
    %c0_4 = arith.constant 0 : index
    %3 = vector.load %arg1[%c24, %c0_4] : memref<136x32xf32, #tpu.memory_space<vmem>>, vector<32x32xf32>
    %c56 = arith.constant 56 : index
    %c0_5 = arith.constant 0 : index
    %4 = vector.load %arg1[%c56, %c0_5] : memref<136x32xf32, #tpu.memory_space<vmem>>, vector<1x32xf32>
    %c64 = arith.constant 64 : index
    %c0_6 = arith.constant 0 : index
    %5 = vector.load %arg1[%c64, %c0_6] : memref<136x32xf32, #tpu.memory_space<vmem>>, vector<32x32xf32>
    %c96 = arith.constant 96 : index
    %c0_7 = arith.constant 0 : index
    %6 = vector.load %arg1[%c96, %c0_7] : memref<136x32xf32, #tpu.memory_space<vmem>>, vector<1x32xf32>
    %c104 = arith.constant 104 : index
    %c0_8 = arith.constant 0 : index
    %7 = vector.load %arg1[%c104, %c0_8] : memref<136x32xf32, #tpu.memory_space<vmem>>, vector<32x32xf32>
    %8 = arith.truncf %0 : vector<8x16xf32> to vector<8x16xbf16>
    %9 = arith.truncf %1 : vector<16x32xf32> to vector<16x32xbf16>
    %cst = arith.constant dense<0.000000e+00> : vector<8x32xf32>
    %10 = tpu.matmul %8, %9, %cst {dimension_numbers = #tpu.dot_dimension_numbers<[1], [0], [0], [1], [0, 0, 1, 1], [], []>} : vector<8x16xbf16>, vector<16x32xbf16>, vector<8x32xf32> -> vector<8x32xf32>
    %11 = vector.broadcast %2 : vector<1x32xf32> to vector<8x32xf32>
    %12 = arith.addf %10, %11 : vector<8x32xf32>
    %cst_9 = arith.constant 0.000000e+00 : f32
    %13 = vector.broadcast %cst_9 : f32 to vector<8x32xf32>
    %14 = arith.maximumf %12, %13 : vector<8x32xf32>
    %15 = arith.truncf %14 : vector<8x32xf32> to vector<8x32xbf16>
    %16 = arith.truncf %3 : vector<32x32xf32> to vector<32x32xbf16>
    %cst_10 = arith.constant dense<0.000000e+00> : vector<8x32xf32>
    %17 = tpu.matmul %15, %16, %cst_10 {dimension_numbers = #tpu.dot_dimension_numbers<[1], [0], [0], [1], [0, 0, 1, 1], [], []>} : vector<8x32xbf16>, vector<32x32xbf16>, vector<8x32xf32> -> vector<8x32xf32>
    %18 = vector.broadcast %4 : vector<1x32xf32> to vector<8x32xf32>
    %19 = arith.addf %17, %18 : vector<8x32xf32>
    %cst_11 = arith.constant 0.000000e+00 : f32
    %20 = vector.broadcast %cst_11 : f32 to vector<8x32xf32>
    %21 = arith.maximumf %19, %20 : vector<8x32xf32>
    %22 = arith.truncf %21 : vector<8x32xf32> to vector<8x32xbf16>
    %23 = arith.truncf %5 : vector<32x32xf32> to vector<32x32xbf16>
    %cst_12 = arith.constant dense<0.000000e+00> : vector<8x32xf32>
    %24 = tpu.matmul %22, %23, %cst_12 {dimension_numbers = #tpu.dot_dimension_numbers<[1], [0], [0], [1], [0, 0, 1, 1], [], []>} : vector<8x32xbf16>, vector<32x32xbf16>, vector<8x32xf32> -> vector<8x32xf32>
    %25 = vector.broadcast %6 : vector<1x32xf32> to vector<8x32xf32>
    %26 = arith.addf %24, %25 : vector<8x32xf32>
    %cst_13 = arith.constant dense<0xFF800000> : vector<8xf32>
    %27 = vector.multi_reduction <maximumf>, %26, %cst_13 [1] : vector<8x32xf32> to vector<8xf32>
    %28 = vector.shape_cast %27 : vector<8xf32> to vector<8x1xf32>
    %29 = vector.broadcast %28 : vector<8x1xf32> to vector<8x32xf32>
    %30 = arith.subf %26, %29 : vector<8x32xf32>
    %31 = math.exp %30 : vector<8x32xf32>
    %cst_14 = arith.constant dense<0.000000e+00> : vector<8x32xf32>
    %32 = tpu.matmul %31, %7, %cst_14 {dimension_numbers = #tpu.dot_dimension_numbers<[1], [0], [0], [1], [0, 0, 1, 1], [], []>, precision = #tpu.contract_precision<fp32>} : vector<8x32xf32>, vector<32x32xf32>, vector<8x32xf32> -> vector<8x32xf32>
    %33 = tpu.reciprocal %32 : vector<8x32xf32> -> vector<8x32xf32>
    %34 = arith.mulf %31, %33 : vector<8x32xf32>
    %c0_15 = arith.constant 0 : index
    %c0_16 = arith.constant 0 : index
    %35 = vector.load %arg2[%c0_15, %c0_16] : memref<8x32xf32, #tpu.memory_space<vmem>>, vector<8x32xf32>
    tpu.vector_store %arg2[%c0_15, %c0_16], %34 {strides = array<i32>} : memref<8x32xf32, #tpu.memory_space<vmem>>, vector<8x32xf32>,
    return
  }
}

</mosaic_0001>

<llo_original>
// kernel: tpu_custom_call.1
$region0: #{tpu_custom_call.1}
  #allocation0 [shape = 'u32[]', space=smem, size = 0x4, offset = 0x4, fixed_abs, tag = 'smem constant byte address 0x4 - core index']
  #allocation1 [shape = 'u32[72,128]{1,0:T(1,128)}', space=vmem, size = 0x9000, scoped, tag = 'internal scratch']
  %s0 = inlined_call_operand.vmem [shape: f32[8,16], index: 0, kind: input, shape index: {}]
  %s1 = inlined_call_operand.vmem [shape: f32[136,32], index: 1, kind: input, shape index: {}]
  %s2 = inlined_call_operand.hbm [shape: f32[8,32], index: 2, kind: output, shape index: {}]
  %s3 = sld [smem:[#allocation0]]
  $region18: #{tpu_custom_call.1} parent=0
    _
  %s5 = ssub.s32 1, %s3
  %s6 = scalar_select 0, %s5, %s3
  $region1: #{tpu_custom_call.1} parent=0
    #allocation2 [shape = 'u8[4096]{0}', space=vmem, size = 0x1000, scoped, tag = 'output window, operand 0, single buffered']
    #allocation3 [shape = 's32[1]{0}', space=sflag, size = 0x4, scoped, tag = 'scoped memory for tpu_custom_call.1']
    %7 = vsyncpa [#allocation3], 0
    // Predicated region
    $region2: #{tpu_custom_call.1} parent=1 // pred_check
      _
    $region3: #{tpu_custom_call.1} parent=1 // pred_check_branch
      %9 = sbr.rel (0) target = $region5
    $region4: #{tpu_custom_call.1} parent=1 // pred_region
      _
    $region5: #{tpu_custom_call.1} parent=1 // pred_fallthru
      _
    // Predicated region
    $region6: #{tpu_custom_call.1} parent=1 // pred_check
      _
    $region7: #{tpu_custom_call.1} parent=1 // pred_check_branch
      %11 = sbr.rel (0) target = $region9
    $region8: #{tpu_custom_call.1} parent=1 // pred_region
      _
    $region9: #{tpu_custom_call.1} parent=1 // pred_fallthru
      _
    %v13 = vld [vmem:[%s0] sm:$0xff]
    %v14 = vld [vmem:[%s1] sm:$0xff]
    %v15 = vld [vmem:[%s1 + $0x8] sm:$0xff]
    %v16 = vld [vmem:[%s1 + $0x10] sm:$0x1]
    %v17 = vld [vmem:[%s1 + $0x18] sm:$0xff]
    %v18 = vld [vmem:[%s1 + $0x20] sm:$0xff]
    %v19 = vld [vmem:[%s1 + $0x28] sm:$0xff]
    %v20 = vld [vmem:[%s1 + $0x30] sm:$0xff]
    %v21 = vld [vmem:[%s1 + $0x38] sm:$0x1]
    %v22 = vld [vmem:[%s1 + $0x40] sm:$0xff]
    %v23 = vld [vmem:[%s1 + $0x48] sm:$0xff]
    %v24 = vld [vmem:[%s1 + $0x50] sm:$0xff]
    %v25 = vld [vmem:[%s1 + $0x58] sm:$0xff]
    %v26 = vld [vmem:[%s1 + $0x60] sm:$0x1]
    %v27 = vld [vmem:[%s1 + $0x68] sm:$0xff]
    %v28 = vld [vmem:[%s1 + $0x70] sm:$0xff]
    %v29 = vld [vmem:[%s1 + $0x78] sm:$0xff]
    %v30 = vld [vmem:[%s1 + $0x80] sm:$0xff]
    %v31 = vpack.c.bf16 %v13, %v13
    %v32 = vpack.c.bf16 %v15, %v14
    %v33 = vperm.slane %v16, 0
    %vm34 = vcmask 130048
    %v36 = vsel %vm34, %v31, 0
    %38 = vmatpush.bf16.msra.mxu0 0
    %39 = vmatpush.bf16.msra.mxu0 0
    %40 = vmatpush.bf16.msra.mxu0 0
    %41 = vmatpush.bf16.msra.mxu0 0
    %42 = vmatpush.bf16.msra.mxu0 0
    %43 = vmatpush.bf16.msra.mxu0 0
    %44 = vmatpush.bf16.msra.mxu0 0
    %45 = vmatpush.bf16.msra.mxu0 %v32
    %46 = vmatmul.bf16.gmra.mxu0 %v36
    %v47 = vpop.f32.mrf.mxu0
    %v48 = vadd.f32 %v33, %v47
    %v49 = vpop.f32.mrf.mxu0
    %50 = vdwg.mxu0
    %v51 = vmax.f32 %v48, 0.0
    %v52 = vpack.c.bf16 %v51, %v51
    %v53 = vpack.c.bf16 %v18, %v17
    %v54 = vpack.c.bf16 %v20, %v19
    %v55 = vperm.slane %v21, 0
    %vm56 = vcmask 261120
    %v58 = vsel %vm56, %v52, 0
    %60 = vmatpush.bf16.msra.mxu0 0
    %61 = vmatpush.bf16.msra.mxu0 0
    %62 = vmatpush.bf16.msra.mxu0 0
    %63 = vmatpush.bf16.msra.mxu0 0
    %64 = vmatpush.bf16.msra.mxu0 0
    %65 = vmatpush.bf16.msra.mxu0 0
    %66 = vmatpush.bf16.msra.mxu0 %v54
    %67 = vmatpush.bf16.msra.mxu0 %v53
    %68 = vmatmul.bf16.gmra.mxu0 %v58
    %v69 = vpop.f32.mrf.mxu0
    %v70 = vadd.f32 %v55, %v69
    %v71 = vpop.f32.mrf.mxu0
    %72 = vdwg.mxu0
    %v73 = vmax.f32 %v70, 0.0
    %v74 = vpack.c.bf16 %v73, %v73
    %v75 = vpack.c.bf16 %v23, %v22
    %v76 = vpack.c.bf16 %v25, %v24
    %v77 = vperm.slane %v26, 0
    %v79 = vsel %vm56, %v74, 0
    %81 = vmatpush.bf16.msra.mxu0 0
    %82 = vmatpush.bf16.msra.mxu0 0
    %83 = vmatpush.bf16.msra.mxu0 0
    %84 = vmatpush.bf16.msra.mxu0 0
    %85 = vmatpush.bf16.msra.mxu0 0
    %86 = vmatpush.bf16.msra.mxu0 0
    %87 = vmatpush.bf16.msra.mxu0 %v76
    %88 = vmatpush.bf16.msra.mxu0 %v75
    %89 = vmatmul.bf16.gmra.mxu0 %v79
    %v90 = vpop.f32.mrf.mxu0
    %v91 = vadd.f32 %v77, %v90
    %v92 = vpop.f32.mrf.mxu0
    %93 = vdwg.mxu0
    %v94 = vsel %vm56, %v91, -inf
    %95 = vmax.xlane.f32.xlu0 %v94
    %v96 = vpop.xlane.xlu0 %95
    %v97 = vsub.f32 %v91, %v96
    %v98 = vmul.f32 %v97, 1.442695
    %v99 = vpow.pop %v98
    %v101 = vsel %vm56, %v99, 0
    %103 = vmatpush.msra.mxu0 0.0
    %104 = vmatpush.msra.mxu0 0.0
    %105 = vmatpush.msra.mxu0 0.0
    %106 = vmatpush.msra.mxu0 0.0
    %107 = vmatpush.msra.mxu0 0.0
    %108 = vmatpush.msra.mxu0 0.0
    %109 = vmatpush.msra.mxu0 0.0
    %110 = vmatpush.msra.mxu0 0.0
    %111 = vmatpush.msra.mxu0 0.0
    %112 = vmatpush.msra.mxu0 0.0
    %113 = vmatpush.msra.mxu0 0.0
    %114 = vmatpush.msra.mxu0 0.0
    %v115 = vand.u32 %v30, 4294901760
    %116 = vmatpush.msra.mxu0 %v115
    %v117 = vand.u32 %v29, 4294901760
    %118 = vmatpush.msra.mxu0 %v117
    %v119 = vand.u32 %v28, 4294901760
    %120 = vmatpush.msra.mxu0 %v119
    %v121 = vand.u32 %v27, 4294901760
    %122 = vmatpush.msra.mxu0 %v121
    %v123 = vand.u32 %v101, 4294901760
    %v124 = vsub.f32 %v101, %v123
    %v125 = vand.u32 %v124, 4294901760
    %v126 = vsub.f32 %v124, %v125
    %v127 = vand.u32 %v126, 4294901760
    %128 = vmatmul.f32.gmra.mxu0 %v127
    %v129 = vpop.f32.mrf.mxu0
    %v130 = vadd.f32 0.0, %v129
    %131 = vdwg.mxu0
    %132 = vmatpush.msra.mxu0 0.0
    %133 = vmatpush.msra.mxu0 0.0
    %134 = vmatpush.msra.mxu0 0.0
    %135 = vmatpush.msra.mxu0 0.0
    %136 = vmatpush.msra.mxu0 0.0
    %137 = vmatpush.msra.mxu0 0.0
    %138 = vmatpush.msra.mxu0 0.0
    %139 = vmatpush.msra.mxu0 0.0
    %140 = vmatpush.msra.mxu0 0.0
    %141 = vmatpush.msra.mxu0 0.0
    %142 = vmatpush.msra.mxu0 0.0
    %143 = vmatpush.msra.mxu0 0.0
    %v144 = vand.u32 %v30, 4294901760
    %v145 = vsub.f32 %v30, %v144
    %v146 = vand.u32 %v145, 4294901760
    %v147 = vsub.f32 %v145, %v146
    %v148 = vand.u32 %v147, 4294901760
    %149 = vmatpush.msra.mxu0 %v148
    %v150 = vand.u32 %v29, 4294901760
    %v151 = vsub.f32 %v29, %v150
    %v152 = vand.u32 %v151, 4294901760
    %v153 = vsub.f32 %v151, %v152
    %v154 = vand.u32 %v153, 4294901760
    %155 = vmatpush.msra.mxu0 %v154
    %v156 = vand.u32 %v28, 4294901760
    %v157 = vsub.f32 %v28, %v156
    %v158 = vand.u32 %v157, 4294901760
    %v159 = vsub.f32 %v157, %v158
    %v160 = vand.u32 %v159, 4294901760
    %161 = vmatpush.msra.mxu0 %v160
    %v162 = vand.u32 %v27, 4294901760
    %v163 = vsub.f32 %v27, %v162
    %v164 = vand.u32 %v163, 4294901760
    %v165 = vsub.f32 %v163, %v164
    %v166 = vand.u32 %v165, 4294901760
    %167 = vmatpush.msra.mxu0 %v166
    %v168 = vand.u32 %v101, 4294901760
    %169 = vmatmul.f32.gmra.mxu0 %v168
    %v170 = vpop.f32.mrf.mxu0
    %v171 = vadd.f32 %v130, %v170
    %172 = vdwg.mxu0
    %173 = vmatpush.msra.mxu0 0.0
    %174 = vmatpush.msra.mxu0 0.0
    %175 = vmatpush.msra.mxu0 0.0
    %176 = vmatpush.msra.mxu0 0.0
    %177 = vmatpush.msra.mxu0 0.0
    %178 = vmatpush.msra.mxu0 0.0
    %179 = vmatpush.msra.mxu0 0.0
    %180 = vmatpush.msra.mxu0 0.0
    %181 = vmatpush.msra.mxu0 0.0
    %182 = vmatpush.msra.mxu0 0.0
    %183 = vmatpush.msra.mxu0 0.0
    %184 = vmatpush.msra.mxu0 0.0
    %v185 = vand.u32 %v30, 4294901760
    %v186 = vsub.f32 %v30, %v185
    %187 = vmatpush.msra.mxu0 %v186
    %v188 = vand.u32 %v29, 4294901760
    %v189 = vsub.f32 %v29, %v188
    %190 = vmatpush.msra.mxu0 %v189
    %v191 = vand.u32 %v28, 4294901760
    %v192 = vsub.f32 %v28, %v191
    %193 = vmatpush.msra.mxu0 %v192
    %v194 = vand.u32 %v27, 4294901760
    %v195 = vsub.f32 %v27, %v194
    %196 = vmatpush.msra.mxu0 %v195
    %v197 = vand.u32 %v101, 4294901760
    %v198 = vsub.f32 %v101, %v197
    %199 = vmatmul.f32.gmra.mxu0 %v198
    %v200 = vpop.f32.mrf.mxu0
    %v201 = vadd.f32 %v171, %v200
    %202 = vdwg.mxu0
    %203 = vmatpush.msra.mxu0 0.0
    %204 = vmatpush.msra.mxu0 0.0
    %205 = vmatpush.msra.mxu0 0.0
    %206 = vmatpush.msra.mxu0 0.0
    %207 = vmatpush.msra.mxu0 0.0
    %208 = vmatpush.msra.mxu0 0.0
    %209 = vmatpush.msra.mxu0 0.0
    %210 = vmatpush.msra.mxu0 0.0
    %211 = vmatpush.msra.mxu0 0.0
    %212 = vmatpush.msra.mxu0 0.0
    %213 = vmatpush.msra.mxu0 0.0
    %214 = vmatpush.msra.mxu0 0.0
    %v215 = vand.u32 %v30, 4294901760
    %216 = vmatpush.msra.mxu0 %v215
    %v217 = vand.u32 %v29, 4294901760
    %218 = vmatpush.msra.mxu0 %v217
    %v219 = vand.u32 %v28, 4294901760
    %220 = vmatpush.msra.mxu0 %v219
    %v221 = vand.u32 %v27, 4294901760
    %222 = vmatpush.msra.mxu0 %v221
    %v223 = vand.u32 %v101, 4294901760
    %v224 = vsub.f32 %v101, %v223
    %v225 = vand.u32 %v224, 4294901760
    %226 = vmatmul.f32.gmra.mxu0 %v225
    %v227 = vpop.f32.mrf.mxu0
    %v228 = vadd.f32 %v201, %v227
    %229 = vdwg.mxu0
    %230 = vmatpush.msra.mxu0 0.0
    %231 = vmatpush.msra.mxu0 0.0
    %232 = vmatpush.msra.mxu0 0.0
    %233 = vmatpush.msra.mxu0 0.0
    %234 = vmatpush.msra.mxu0 0.0
    %235 = vmatpush.msra.mxu0 0.0
    %236 = vmatpush.msra.mxu0 0.0
    %237 = vmatpush.msra.mxu0 0.0
    %238 = vmatpush.msra.mxu0 0.0
    %239 = vmatpush.msra.mxu0 0.0
    %240 = vmatpush.msra.mxu0 0.0
    %241 = vmatpush.msra.mxu0 0.0
    %v242 = vand.u32 %v30, 4294901760
    %v243 = vsub.f32 %v30, %v242
    %v244 = vand.u32 %v243, 4294901760
    %245 = vmatpush.msra.mxu0 %v244
    %v246 = vand.u32 %v29, 4294901760
    %v247 = vsub.f32 %v29, %v246
    %v248 = vand.u32 %v247, 4294901760
    %249 = vmatpush.msra.mxu0 %v248
    %v250 = vand.u32 %v28, 4294901760
    %v251 = vsub.f32 %v28, %v250
    %v252 = vand.u32 %v251, 4294901760
    %253 = vmatpush.msra.mxu0 %v252
    %v254 = vand.u32 %v27, 4294901760
    %v255 = vsub.f32 %v27, %v254
    %v256 = vand.u32 %v255, 4294901760
    %257 = vmatpush.msra.mxu0 %v256
    %v258 = vand.u32 %v101, 4294901760
    %259 = vmatmul.f32.gmra.mxu0 %v258
    %v260 = vpop.f32.mrf.mxu0
    %v261 = vadd.f32 %v228, %v260
    %262 = vdwg.mxu0
    %263 = vmatpush.msra.mxu0 0.0
    %264 = vmatpush.msra.mxu0 0.0
    %265 = vmatpush.msra.mxu0 0.0
    %266 = vmatpush.msra.mxu0 0.0
    %267 = vmatpush.msra.mxu0 0.0
    %268 = vmatpush.msra.mxu0 0.0
    %269 = vmatpush.msra.mxu0 0.0
    %270 = vmatpush.msra.mxu0 0.0
    %271 = vmatpush.msra.mxu0 0.0
    %272 = vmatpush.msra.mxu0 0.0
    %273 = vmatpush.msra.mxu0 0.0
    %274 = vmatpush.msra.mxu0 0.0
    %v275 = vand.u32 %v30, 4294901760
    %276 = vmatpush.msra.mxu0 %v275
    %v277 = vand.u32 %v29, 4294901760
    %278 = vmatpush.msra.mxu0 %v277
    %v279 = vand.u32 %v28, 4294901760
    %280 = vmatpush.msra.mxu0 %v279
    %v281 = vand.u32 %v27, 4294901760
    %282 = vmatpush.msra.mxu0 %v281
    %v283 = vand.u32 %v101, 4294901760
    %284 = vmatmul.f32.gmra.mxu0 %v283
    %v285 = vpop.f32.mrf.mxu0
    %v286 = vadd.f32 %v261, %v285
    %287 = vdwg.mxu0
    %v288 = vrcp.pop %v286
    %v289 = vmul.f32 %v286, %v288
    %v290 = vsub.f32 1.0, %v289
    %v291 = vmul.f32 %v288, %v290
    %v292 = vadd.f32 %v288, %v291
    %vm293 = vweird.f32 %v286
    %vm294 = vweird.f32 %v288
    %vm295 = vmor %vm293, %vm294
    %v296 = vsel %vm295, %v288, %v292
    %v297 = vand.u32 2147483647, %v286
    %vm298 = vcmp.eq.f32.partialorder %v297, 8.507059e+37
    %v299 = vand.u32 %v286, 2147483648
    %v300 = vor.u32 1.1754944e-38, %v299
    %v301 = vsel %vm298, %v300, %v296
    %v302 = vmul.f32 %v99, %v301
    %303 = vst.msk [vmem:[#allocation2] sm:$0xff] %vm56, %v302
    // Predicated region
    $region10: #{tpu_custom_call.1} parent=1 // pred_check
      _
    $region11: #{tpu_custom_call.1} parent=1 // pred_check_branch
      %305 = sbr.rel (0) target = $region13
    $region12: #{tpu_custom_call.1} parent=1 // pred_region
      %307 = vsyncadd [#allocation3], 0
      %s309 = sshll.u32 [#allocation2], 4
      %s310 = int_to_ptr.vmem [resolvable:$true] %s309
      %s311 = sshll.u32 %s2, 4
      %s312 = int_to_ptr.hbm [resolvable:$true] %s311
      %314 = dma.vmem_to_hbm [thread:$0]  %s310, 128, %s312, [#allocation3]
    $region13: #{tpu_custom_call.1} parent=1 // pred_fallthru
      _
    // Predicated region
    $region14: #{tpu_custom_call.1} parent=1 // pred_check
      _
    $region15: #{tpu_custom_call.1} parent=1 // pred_check_branch
      %316 = sbr.rel (0) target = $region17
    $region16: #{tpu_custom_call.1} parent=1 // pred_region
      %318 = dma.done [#allocation3], 128
    $region17: #{tpu_custom_call.1} parent=1 // pred_fallthru
      _
    %319 = vsyncpa [#allocation3], 1

</llo_original>
